<compile_context>
chip_gen: v5e
topology: v5e:2x2
jax: 0.10.0
libtpu: 0.0.40
codegen_flags: <defaults>
</compile_context>

<pallas_src>
import jax
import jax.numpy as jnp
from jax.experimental import pallas as pl
from jax.experimental.pallas import tpu as pltpu

NUM_HEADS = 12
HEAD_DIM = 64
HIDDEN = NUM_HEADS * HEAD_DIM  # 768, fixed by the module (x75 = x74 + (12, 64))


def hbm_copy_kernel(x_hbm, o_hbm, sem):
    # One HBM->HBM DMA descriptor: no VMEM staging, no grid, no per-step cost.
    cp = pltpu.make_async_copy(x_hbm, o_hbm, sem)
    cp.start()
    cp.wait()


def add_view(x74, x72):
    """Replicates M.forward: x75 = x74 + (12, 64); return x72.view(x75)."""
    x75 = tuple(x74) + (NUM_HEADS, HEAD_DIM)
    b, s, h = x72.shape
    assert (b, s) == tuple(x74) and h == HIDDEN

    # Free wrapper-side flatten (metadata only): a single contiguous 2-D slab,
    # lane-dense last dim, so the DMA is one contiguous transfer regardless of
    # B / S / dtype — no (8,128) or sublane-pack concerns, no size-1 batch dim.
    flat_in = x72.reshape(b * s, h)

    bytes_accessed = 2 * b * s * h * jnp.dtype(x72.dtype).itemsize

    flat_out = pl.pallas_call(
        hbm_copy_kernel,
        out_shape=jax.ShapeDtypeStruct((b * s, h), x72.dtype),
        in_specs=[pl.BlockSpec(memory_space=pl.ANY)],
        out_specs=pl.BlockSpec(memory_space=pl.ANY),
        scratch_shapes=[pltpu.SemaphoreType.DMA],
        cost_estimate=pl.CostEstimate(
            flops=0, transcendentals=0, bytes_accessed=bytes_accessed
        ),
    )(flat_in)

    # TODO(synk): in production, drop this pallas_call entirely (view is
    # metadata-only) or alias+donate the input so XLA can elide the copy.
    # The actual "view": free metadata-only reshape in the wrapper.
    return flat_out.reshape(x75)


if __name__ == "__main__":
    # Shapes taken directly from the module spec: (1, 384, 768); the head
    # structure (12, 64) forces hidden = 768.
    B, S = 1, 384
    x74 = (B, S)
    key = jax.random.PRNGKey(0)
    x72 = jax.random.normal(key, (B, S, HIDDEN), dtype=jnp.float32)

    out = add_view(x74, x72)
    out = jax.block_until_ready(out)

    # Reference check against plain JAX reshape (the semantics of .view).
    ref = x72.reshape((B, S, NUM_HEADS, HEAD_DIM))
    assert out.shape == (B, S, NUM_HEADS, HEAD_DIM)
    assert out.dtype == x72.dtype
    assert bool(jnp.array_equal(out, ref))

    print("KERNEL_OK")
</pallas_src>

<mosaic_0001>
module attributes {stable_mosaic.version = 11 : i64} {
  func.func @hbm_copy_kernel(%arg0: memref<384x768xf32, #tpu.memory_space<any>>, %arg1: memref<384x768xf32, #tpu.memory_space<any>>, %arg2: memref<!tpu.dma_semaphore, #tpu.memory_space<semaphore_mem>>) attributes {dimension_semantics = [], scalar_prefetch = 0 : i64, scratch_operands = 1 : i64, tpu.core_type = #tpu.core_type<tc>} {
    tpu.enqueue_dma source(%arg0 : memref<384x768xf32, #tpu.memory_space<any>>) target(%arg1 : memref<384x768xf32, #tpu.memory_space<any>>) target_semaphore(%arg2 : memref<!tpu.dma_semaphore, #tpu.memory_space<semaphore_mem>>)
    tpu.wait_dma2 semaphore(%arg2 : memref<!tpu.dma_semaphore, #tpu.memory_space<semaphore_mem>>) src(%arg0 : memref<384x768xf32, #tpu.memory_space<any>>) dst(%arg1 : memref<384x768xf32, #tpu.memory_space<any>>)
    return
  }
}

</mosaic_0001>

<llo_original>
// kernel: tpu_custom_call.1
$region0: #{tpu_custom_call.1}
  #allocation0 [shape = 'u32[]', space=smem, size = 0x4, offset = 0x4, fixed_abs, tag = 'smem constant byte address 0x4 - core index']
  #allocation1 [shape = 'u32[72,128]{1,0:T(1,128)}', space=vmem, size = 0x9000, scoped, tag = 'internal scratch']
  #allocation2 [shape = 's32[1]{0}', space=sflag, size = 0x4, scoped, tag = 'scratch operand']
  #allocation3 [shape = 's32[]', space=sflag, size = 0x4, offset = 0, fixed_abs, tag = 'sflag constant byte address 0x0 - dummy sync flag']
  #allocation4 [shape = 'u32[0]{0}', space=smem, size = 0, offset = 0, fixed_abs, tag = 'smem constant byte address 0x0 - null']
  %s0 = inlined_call_operand.hbm [shape: f32[384,768], index: 0, kind: input, shape index: {}]
  %s1 = inlined_call_operand.hbm [shape: f32[384,768], index: 1, kind: output, shape index: {}]
  %s2 = sld [smem:[#allocation0]]
  $region2: #{tpu_custom_call.1} parent=0
    _
  %s4 = ssub.s32 1, %s2
  %s5 = scalar_select 0, %s4, %s2
  %s7 = sshll.u32 1, 14
  %s8 = sxor.u32 4294967295, %s7
  %s10 = sshll.u32 %s0, 4
  %s11 = int_to_ptr.hbm [resolvable:$true] %s10
  %s12 = sshll.u32 %s1, 4
  %s13 = int_to_ptr.hbm [resolvable:$true] %s12
  %16 = dma.general %s11, 36864, %s13, [#allocation2], [#allocation3], [#allocation4], 0, 0
  %s17 = smul.u32 8, 48
  %s18 = smul.u32 %s17, 6
  %s19 = sshll.u32 %s18, 4
  %20 = dma.done [#allocation2], %s19
  %21 = vsyncmov [#allocation2]
  %s22 = vpop.sfrf %21
  %p23 = scmp.eq.s32.totalorder %s22, 0
  %p24 = pneg %p23
  %26 = shalt.err (%p24)

</llo_original>
